<compile_context>
chip_gen: v7x
topology: tpu7x:2x2x1
jax: 0.10.0
libtpu: 0.0.40
codegen_flags: <defaults>
</compile_context>

<pallas_src>
import jax
import jax.numpy as jnp
from jax.experimental import pallas as pl
from jax.experimental.pallas import tpu as pltpu


# ---------------------------------------------------------------------------
# Kernel
# ---------------------------------------------------------------------------
def _basic_block_kernel(x_ref, w1_ref, b1_ref, w2_ref, b2_ref, o_ref):
    """Fused BasicBlock for one block of NB samples, packed channels-last.

    x_ref  : (NB, H, W*C)         input samples, f32
    w1_ref : (3*W*C, W*C)         conv1 stacked width-Toeplitz weight
                                  (BN1 scale folded), bf16
    b1_ref : (1, W*C)             packed BN1 bias, f32
    w2_ref : (3*W*C, W*C)         conv2 stacked width-Toeplitz weight
                                  (BN2 scale folded), bf16
    b2_ref : (1, W*C)             packed BN2 bias, f32
    o_ref  : (NB, H, W*C)         output samples
    """
    NB, H, WC = x_ref.shape
    M = NB * H

    # Flatten the whole block into one tall matmul operand (M = NB*H rows).
    x2 = x_ref[...].reshape(M, WC)                      # f32; kept for residual

    zrow = jnp.zeros((1, WC), jnp.float32)              # hoisted (shared by both convs)

    # Per-sample boundary masks for the height halo (pad=1).  Only needed when
    # several samples are stacked along the row axis.
    if NB > 1:
        r = jax.lax.broadcasted_iota(jnp.int32, (M, WC), 0)
        rh = jax.lax.rem(r, H)
        not_top = rh != 0            # rows whose x[h-1] slab is valid
        not_bot = rh != (H - 1)      # rows whose x[h+1] slab is valid
    else:
        not_top = not_bot = None

    bias1 = b1_ref[...]                                  # (1, WC) f32
    bias2 = b2_ref[...]

    def conv3x3(h, w_ref):
        """3x3 conv, stride 1, pad 1, as ONE K=3*WC MXU push.

        h: (M, WC) f32.  Width taps + width zero-pad live in the Toeplitz band
        of w_ref; the height taps are packed along lanes of the LHS.
        """
        down = jnp.concatenate([zrow, h[:M - 1, :]], axis=0)   # row r <- h[r-1]
        up = jnp.concatenate([h[1:, :], zrow], axis=0)         # row r <- h[r+1]
        if NB > 1:
            down = jnp.where(not_top, down, 0.0)               # zero sample tops
            up = jnp.where(not_bot, up, 0.0)                   # zero sample bottoms
        # Lane-packed LHS: [x[h-1] | x[h] | x[h+1]]  -> (M, 3*WC), cast once.
        lhs = jnp.concatenate([down, h, up], axis=1).astype(jnp.bfloat16)
        return jnp.dot(lhs, w_ref[...],
                       preferred_element_type=jnp.float32)     # (M, WC) f32

    h1 = jnp.maximum(conv3x3(x2, w1_ref) + bias1, 0.0)          # conv1 + bn1 + relu
    h2 = conv3x3(h1, w2_ref) + bias2                            # conv2 + bn2
    y = jnp.maximum(h2 + x2, 0.0)                               # + residual, relu
    o_ref[...] = y.reshape(NB, H, WC).astype(o_ref.dtype)


# ---------------------------------------------------------------------------
# Wrapper-side (trace-time) weight preparation
# ---------------------------------------------------------------------------
def _fold_bn(gamma, beta, mean, var, eps=1e-5):
    scale = gamma / jnp.sqrt(var + eps)
    return scale, beta - mean * scale


def _toeplitz_weight(w_hwio, W):
    """(3, 3, Cin, Cout) conv weight -> (3, W*Cin, W*Cout) width-Toeplitz matrices.

    T[kh, wi*Cin + ci, wo*Cout + co] = w[kh, wi - wo + 1, ci, co] when the tap
    index is in [0, 3), else 0.  Width zero-padding is implicit (out-of-range
    taps vanish from the band).
    """
    KH, KW, Cin, Cout = w_hwio.shape
    wi = jnp.arange(W)
    wo = jnp.arange(W)
    kw = wi[:, None] - wo[None, :] + (KW // 2)                   # (W, W)
    valid = (kw >= 0) & (kw < KW)
    blocks = w_hwio[:, jnp.clip(kw, 0, KW - 1)]                  # (KH, W, W, Cin, Cout)
    blocks = jnp.where(valid[None, :, :, None, None], blocks, 0.0)
    return blocks.transpose(0, 1, 3, 2, 4).reshape(KH, W * Cin, W * Cout)


# ---------------------------------------------------------------------------
# Forward
# ---------------------------------------------------------------------------
def basic_block_forward(x_nchw, params, eps=1e-5):
    """BasicBlock forward (stride=1, downsample=None). Input/output are NCHW."""
    N, Cin, H, W = x_nchw.shape
    Cout = params["conv1_w"].shape[-1]
    assert params["conv1_w"].shape == (3, 3, Cin, Cout)
    assert Cin == Cout, "stride=1 / downsample=None path requires inplanes == planes"
    WC_in, WC_out = W * Cin, W * Cout
    # Lane-dense layout requirement (unmasked stores, 128-wide MXU operands).
    assert WC_in % 128 == 0 and WC_out % 128 == 0, (
        "W*C must be a multiple of 128 for the packed-width layout")

    s1, b1 = _fold_bn(params["bn1_gamma"], params["bn1_beta"],
                      params["bn1_mean"], params["bn1_var"], eps)
    s2, b2 = _fold_bn(params["bn2_gamma"], params["bn2_beta"],
                      params["bn2_mean"], params["bn2_var"], eps)

    # Fold BN scale into the conv weights; build stacked (3*WC, WC) Toeplitz
    # weights (bf16, single MXU push per conv) and packed per-lane biases (f32).
    w1 = _toeplitz_weight(params["conv1_w"] * s1, W).reshape(
        3 * WC_in, WC_out).astype(jnp.bfloat16)
    w2 = _toeplitz_weight(params["conv2_w"] * s2, W).reshape(
        3 * WC_out, WC_out).astype(jnp.bfloat16)
    b1p = jnp.tile(b1, W).reshape(1, WC_out).astype(jnp.float32)
    b2p = jnp.tile(b2, W).reshape(1, WC_out).astype(jnp.float32)

    # Grid: 2 "parallel" blocks when possible (keeps both v7x TensorCores
    # busy); each block batches NB = N/G samples into the matmul M dimension.
    G = 2 if (N % 2 == 0 and N >= 2) else 1
    NB = N // G

    # NCHW -> packed channels-last (N, H, W*C).
    x_p = jnp.transpose(x_nchw, (0, 2, 3, 1)).reshape(N, H, WC_in)

    out_p = pl.pallas_call(
        _basic_block_kernel,
        out_shape=jax.ShapeDtypeStruct((N, H, WC_out), x_nchw.dtype),
        grid_spec=pltpu.PrefetchScalarGridSpec(
            num_scalar_prefetch=0,
            grid=(G,),
            in_specs=[
                pl.BlockSpec((NB, H, WC_in), lambda g: (g, 0, 0)),
                pl.BlockSpec((3 * WC_in, WC_out), lambda g: (0, 0)),
                pl.BlockSpec((1, WC_out), lambda g: (0, 0)),
                pl.BlockSpec((3 * WC_out, WC_out), lambda g: (0, 0)),
                pl.BlockSpec((1, WC_out), lambda g: (0, 0)),
            ],
            out_specs=pl.BlockSpec((NB, H, WC_out), lambda g: (g, 0, 0)),
        ),
        compiler_params=pltpu.CompilerParams(
            dimension_semantics=("parallel",)),
    )(x_p, w1, b1p, w2, b2p)

    return jnp.transpose(out_p.reshape(N, H, W, Cout), (0, 3, 1, 2))


# ---------------------------------------------------------------------------
# Pure-JAX reference for correctness checking
# ---------------------------------------------------------------------------
def _reference_forward(x_nchw, params):
    def conv(x, w_hwio):
        w_oihw = jnp.transpose(w_hwio, (3, 2, 0, 1))
        return jax.lax.conv_general_dilated(
            x, w_oihw, window_strides=(1, 1), padding=((1, 1), (1, 1)),
            dimension_numbers=("NCHW", "OIHW", "NCHW"))

    def bn(x, g, b, m, v, eps=1e-5):
        g, b, m, v = (t.reshape(1, -1, 1, 1) for t in (g, b, m, v))
        return (x - m) / jnp.sqrt(v + eps) * g + b

    out = jax.nn.relu(bn(conv(x_nchw, params["conv1_w"]),
                         params["bn1_gamma"], params["bn1_beta"],
                         params["bn1_mean"], params["bn1_var"]))
    out = bn(conv(out, params["conv2_w"]),
             params["bn2_gamma"], params["bn2_beta"],
             params["bn2_mean"], params["bn2_var"])
    return jax.nn.relu(out + x_nchw)


if __name__ == "__main__":
    key = jax.random.PRNGKey(0)
    N, C, H, W = 4, 8, 16, 16          # inplanes = planes = 8, stride = 1
    ks = jax.random.split(key, 8)

    x = jax.random.normal(ks[0], (N, C, H, W), jnp.float32)
    params = {
        # conv weights stored as (KH, KW, Cin, Cout)
        "conv1_w": 0.1 * jax.random.normal(ks[1], (3, 3, C, C), jnp.float32),
        "conv2_w": 0.1 * jax.random.normal(ks[2], (3, 3, C, C), jnp.float32),
        "bn1_gamma": 1.0 + 0.1 * jax.random.normal(ks[3], (C,), jnp.float32),
        "bn1_beta": 0.1 * jax.random.normal(ks[4], (C,), jnp.float32),
        "bn1_mean": 0.05 * jax.random.normal(ks[5], (C,), jnp.float32),
        "bn1_var": jnp.abs(1.0 + 0.1 * jax.random.normal(ks[6], (C,), jnp.float32)),
        "bn2_gamma": 1.0 + 0.05 * jax.random.normal(ks[7], (C,), jnp.float32),
        "bn2_beta": jnp.linspace(-0.1, 0.1, C).astype(jnp.float32),
        "bn2_mean": jnp.linspace(-0.05, 0.05, C).astype(jnp.float32),
        "bn2_var": jnp.linspace(0.9, 1.1, C).astype(jnp.float32),
    }

    fwd = jax.jit(basic_block_forward)
    out = jax.block_until_ready(fwd(x, params))
    ref = jax.block_until_ready(_reference_forward(x, params))

    assert out.shape == (N, C, H, W)
    err = float(jnp.max(jnp.abs(out - ref)))
    # bf16 MXU inputs with f32 accumulation: slightly loose tolerance.
    assert err < 5e-2, f"max abs err = {err}"
    print("KERNEL_OK")
</pallas_src>

<mosaic_0001>
module attributes {stable_mosaic.version = 11 : i64} {
  func.func @_basic_block_kernel(%arg0: i32, %arg1: memref<2x16x128xf32, #tpu.memory_space<vmem>>, %arg2: memref<384x128xbf16, #tpu.memory_space<vmem>>, %arg3: memref<1x128xf32, #tpu.memory_space<vmem>>, %arg4: memref<384x128xbf16, #tpu.memory_space<vmem>>, %arg5: memref<1x128xf32, #tpu.memory_space<vmem>>, %arg6: memref<2x16x128xf32, #tpu.memory_space<vmem>>) attributes {dimension_semantics = [#tpu.dimension_semantics<parallel>], iteration_bounds = array<i64: 2>, scalar_prefetch = 0 : i64, scratch_operands = 0 : i64, tpu.core_type = #tpu.core_type<tc>, window_params = [{transform_indices = @transform_0, window_bounds = array<i64: 2, 16, 128>}, {pipeline_mode = #tpu.pipeline_mode<synchronous>, transform_indices = @transform_1, window_bounds = array<i64: 384, 128>}, {pipeline_mode = #tpu.pipeline_mode<synchronous>, transform_indices = @transform_2, window_bounds = array<i64: 1, 128>}, {pipeline_mode = #tpu.pipeline_mode<synchronous>, transform_indices = @transform_3, window_bounds = array<i64: 384, 128>}, {pipeline_mode = #tpu.pipeline_mode<synchronous>, transform_indices = @transform_4, window_bounds = array<i64: 1, 128>}, {transform_indices = @transform_5, window_bounds = array<i64: 2, 16, 128>}]} {
    %c0 = arith.constant 0 : index
    %c0_0 = arith.constant 0 : index
    %c0_1 = arith.constant 0 : index
    %0 = vector.load %arg1[%c0, %c0_0, %c0_1] : memref<2x16x128xf32, #tpu.memory_space<vmem>>, vector<2x16x128xf32>
    %1 = vector.shape_cast %0 : vector<2x16x128xf32> to vector<32x128xf32>
    %cst = arith.constant 0.000000e+00 : f32
    %2 = vector.broadcast %cst : f32 to vector<1x128xf32>
    %3 = tpu.iota {dimensions = array<i32: 0>} : vector<32x128xi32>
    %c16_i32 = arith.constant 16 : i32
    %4 = vector.broadcast %c16_i32 : i32 to vector<32x128xi32>
    %5 = arith.remsi %3, %4 : vector<32x128xi32>
    %c0_i32 = arith.constant 0 : i32
    %6 = vector.broadcast %c0_i32 : i32 to vector<32x128xi32>
    %7 = arith.cmpi ne, %5, %6 : vector<32x128xi32>
    %c15_i32 = arith.constant 15 : i32
    %8 = vector.broadcast %c15_i32 : i32 to vector<32x128xi32>
    %9 = arith.cmpi ne, %5, %8 : vector<32x128xi32>
    %c0_2 = arith.constant 0 : index
    %c0_3 = arith.constant 0 : index
    %10 = vector.load %arg3[%c0_2, %c0_3] : memref<1x128xf32, #tpu.memory_space<vmem>>, vector<1x128xf32>
    %c0_4 = arith.constant 0 : index
    %c0_5 = arith.constant 0 : index
    %11 = vector.load %arg5[%c0_4, %c0_5] : memref<1x128xf32, #tpu.memory_space<vmem>>, vector<1x128xf32>
    %12 = vector.extract_strided_slice %1 {offsets = [0, 0], sizes = [31, 128], strides = [1, 1]} : vector<32x128xf32> to vector<31x128xf32>
    %13 = tpu.concatenate %2, %12 in 0 : vector<1x128xf32>, vector<31x128xf32> -> vector<32x128xf32>
    %14 = vector.extract_strided_slice %1 {offsets = [1, 0], sizes = [31, 128], strides = [1, 1]} : vector<32x128xf32> to vector<31x128xf32>
    %15 = tpu.concatenate %14, %2 in 0 : vector<31x128xf32>, vector<1x128xf32> -> vector<32x128xf32>
    %cst_6 = arith.constant 0.000000e+00 : f32
    %16 = vector.broadcast %cst_6 : f32 to vector<32x128xf32>
    %17 = arith.select %7, %13, %16 : vector<32x128xi1>, vector<32x128xf32>
    %cst_7 = arith.constant 0.000000e+00 : f32
    %18 = vector.broadcast %cst_7 : f32 to vector<32x128xf32>
    %19 = arith.select %9, %15, %18 : vector<32x128xi1>, vector<32x128xf32>
    %20 = tpu.concatenate %17, %1, %19 in 1 : vector<32x128xf32>, vector<32x128xf32>, vector<32x128xf32> -> vector<32x384xf32>
    %21 = arith.truncf %20 : vector<32x384xf32> to vector<32x384xbf16>
    %c0_8 = arith.constant 0 : index
    %c0_9 = arith.constant 0 : index
    %22 = vector.load %arg2[%c0_8, %c0_9] : memref<384x128xbf16, #tpu.memory_space<vmem>>, vector<384x128xbf16>
    %cst_10 = arith.constant dense<0.000000e+00> : vector<32x128xf32>
    %23 = tpu.matmul %21, %22, %cst_10 {dimension_numbers = #tpu.dot_dimension_numbers<[1], [0], [0], [1], [0, 0, 1, 1], [], []>} : vector<32x384xbf16>, vector<384x128xbf16>, vector<32x128xf32> -> vector<32x128xf32>
    %24 = vector.broadcast %10 : vector<1x128xf32> to vector<32x128xf32>
    %25 = arith.addf %23, %24 : vector<32x128xf32>
    %cst_11 = arith.constant 0.000000e+00 : f32
    %26 = vector.broadcast %cst_11 : f32 to vector<32x128xf32>
    %27 = arith.maximumf %25, %26 : vector<32x128xf32>
    %28 = vector.extract_strided_slice %27 {offsets = [0, 0], sizes = [31, 128], strides = [1, 1]} : vector<32x128xf32> to vector<31x128xf32>
    %29 = tpu.concatenate %2, %28 in 0 : vector<1x128xf32>, vector<31x128xf32> -> vector<32x128xf32>
    %30 = vector.extract_strided_slice %27 {offsets = [1, 0], sizes = [31, 128], strides = [1, 1]} : vector<32x128xf32> to vector<31x128xf32>
    %31 = tpu.concatenate %30, %2 in 0 : vector<31x128xf32>, vector<1x128xf32> -> vector<32x128xf32>
    %cst_12 = arith.constant 0.000000e+00 : f32
    %32 = vector.broadcast %cst_12 : f32 to vector<32x128xf32>
    %33 = arith.select %7, %29, %32 : vector<32x128xi1>, vector<32x128xf32>
    %cst_13 = arith.constant 0.000000e+00 : f32
    %34 = vector.broadcast %cst_13 : f32 to vector<32x128xf32>
    %35 = arith.select %9, %31, %34 : vector<32x128xi1>, vector<32x128xf32>
    %36 = tpu.concatenate %33, %27, %35 in 1 : vector<32x128xf32>, vector<32x128xf32>, vector<32x128xf32> -> vector<32x384xf32>
    %37 = arith.truncf %36 : vector<32x384xf32> to vector<32x384xbf16>
    %c0_14 = arith.constant 0 : index
    %c0_15 = arith.constant 0 : index
    %38 = vector.load %arg4[%c0_14, %c0_15] : memref<384x128xbf16, #tpu.memory_space<vmem>>, vector<384x128xbf16>
    %cst_16 = arith.constant dense<0.000000e+00> : vector<32x128xf32>
    %39 = tpu.matmul %37, %38, %cst_16 {dimension_numbers = #tpu.dot_dimension_numbers<[1], [0], [0], [1], [0, 0, 1, 1], [], []>} : vector<32x384xbf16>, vector<384x128xbf16>, vector<32x128xf32> -> vector<32x128xf32>
    %40 = vector.broadcast %11 : vector<1x128xf32> to vector<32x128xf32>
    %41 = arith.addf %39, %40 : vector<32x128xf32>
    %42 = arith.addf %41, %1 : vector<32x128xf32>
    %cst_17 = arith.constant 0.000000e+00 : f32
    %43 = vector.broadcast %cst_17 : f32 to vector<32x128xf32>
    %44 = arith.maximumf %42, %43 : vector<32x128xf32>
    %45 = vector.shape_cast %44 : vector<32x128xf32> to vector<2x16x128xf32>
    %c0_18 = arith.constant 0 : index
    %c0_19 = arith.constant 0 : index
    %c0_20 = arith.constant 0 : index
    %46 = vector.load %arg6[%c0_18, %c0_19, %c0_20] : memref<2x16x128xf32, #tpu.memory_space<vmem>>, vector<2x16x128xf32>
    tpu.vector_store %arg6[%c0_18, %c0_19, %c0_20], %45 {strides = array<i32>} : memref<2x16x128xf32, #tpu.memory_space<vmem>>, vector<2x16x128xf32>,
    return
  }
  func.func @transform_0(%arg0: i32) -> (i32, i32, i32) {
    %c0_i32 = arith.constant 0 : i32
    %c0_i32_0 = arith.constant 0 : i32
    %c0_i32_1 = arith.constant 0 : i32
    return %arg0, %c0_i32, %c0_i32_0 : i32, i32, i32
  }
  func.func @transform_1(%arg0: i32) -> (i32, i32) {
    %c0_i32 = arith.constant 0 : i32
    %c0_i32_0 = arith.constant 0 : i32
    %c0_i32_1 = arith.constant 0 : i32
    return %c0_i32, %c0_i32_0 : i32, i32
  }
  func.func @transform_2(%arg0: i32) -> (i32, i32) {
    %c0_i32 = arith.constant 0 : i32
    %c0_i32_0 = arith.constant 0 : i32
    %c0_i32_1 = arith.constant 0 : i32
    return %c0_i32, %c0_i32_0 : i32, i32
  }
  func.func @transform_3(%arg0: i32) -> (i32, i32) {
    %c0_i32 = arith.constant 0 : i32
    %c0_i32_0 = arith.constant 0 : i32
    %c0_i32_1 = arith.constant 0 : i32
    return %c0_i32, %c0_i32_0 : i32, i32
  }
  func.func @transform_4(%arg0: i32) -> (i32, i32) {
    %c0_i32 = arith.constant 0 : i32
    %c0_i32_0 = arith.constant 0 : i32
    %c0_i32_1 = arith.constant 0 : i32
    return %c0_i32, %c0_i32_0 : i32, i32
  }
  func.func @transform_5(%arg0: i32) -> (i32, i32, i32) {
    %c0_i32 = arith.constant 0 : i32
    %c0_i32_0 = arith.constant 0 : i32
    %c0_i32_1 = arith.constant 0 : i32
    return %arg0, %c0_i32, %c0_i32_0 : i32, i32, i32
  }
}

</mosaic_0001>

<llo_original>
// kernel: tile.13
$region0: #{tile.13}
  #allocation0 [shape = 's32[1]{0}', space=sflag, size = 0x4, scoped, tag = 'scoped memory for tile.13']
  %s0 = inlined_call_operand.vmem [shape: f32[8], index: 0, kind: input, shape index: {}]
  %s1 = inlined_call_operand.vmem [shape: f32[16,8], index: 1, kind: output, shape index: {}]
  // Predicated region
  $region2: #{tile.13} parent=0 // pred_check
    _
  $region3: #{tile.13} parent=0 // pred_check_branch
    %3 = sbr.rel (0) target = $region5
  $region4: #{tile.13} parent=0 // pred_region
    _
  $region5: #{tile.13} parent=0 // pred_fallthru
    _
  %v4 = vld [vmem:[%s0] ss:$0 sm:$0xff]
  %5 = vst [vmem:[%s1] sm:$0xff] %v4
  %s6 = scalar_lea.vmem %s1, 8
  %7 = vst [vmem:[%s6] sm:$0xff] %v4

// kernel: tile.14
$region0: #{tile.14}
  %s0 = inlined_call_operand.vmem [shape: f32[16,8], index: 0, kind: input, shape index: {}]
  %s1 = inlined_call_operand.vmem [shape: f32[1,128], index: 1, kind: output, shape index: {}]
  $region1: #{tile.14} parent=0
    #allocation0 [shape = 'u8[4096]{0}', space=vmem, size = 0x1000, scoped, tag = 'scoped mem for output reshape']
    %v2 = vld [vmem:[%s0] sm:$0x1]
    %vm3 = vcmask 64512
    %4 = vst.msk [vmem:[#allocation0] sm:$0x1] %vm3, %v2
    %s5 = scalar_lea.vmem %s0, 15
    %v6 = vld [vmem:[%s5] sm:$0x1]
    %7 = vrot.lane.b32.xlu0 %v6, 120
    %v8 = vpop.permute.xlu0 %7
    %vm9 = vcmask 1048512
    %10 = vst.msk [vmem:[#allocation0] sm:$0x1] %vm9, %v8
    %s11 = scalar_lea.vmem %s0, 14
    %v12 = vld [vmem:[%s11] sm:$0x1]
    %13 = vrot.lane.b32.xlu0 %v12, 112
    %v14 = vpop.permute.xlu0 %13
    %vm15 = vcmask 982912
    %16 = vst.msk [vmem:[#allocation0] sm:$0x1] %vm15, %v14
    %s17 = scalar_lea.vmem %s0, 13
    %v18 = vld [vmem:[%s17] sm:$0x1]
    %19 = vrot.lane.b32.xlu0 %v18, 104
    %v20 = vpop.permute.xlu0 %19
    %vm21 = vcmask 917312
    %22 = vst.msk [vmem:[#allocation0] sm:$0x1] %vm21, %v20
    %s23 = scalar_lea.vmem %s0, 12
    %v24 = vld [vmem:[%s23] sm:$0x1]
    %25 = vrot.lane.b32.xlu0 %v24, 96
    %v26 = vpop.permute.xlu0 %25
    %vm27 = vcmask 851712
    %28 = vst.msk [vmem:[#allocation0] sm:$0x1] %vm27, %v26
    %s29 = scalar_lea.vmem %s0, 11
    %v30 = vld [vmem:[%s29] sm:$0x1]
    %31 = vrot.lane.b32.xlu0 %v30, 88
    %v32 = vpop.permute.xlu0 %31
    %vm33 = vcmask 786112
    %34 = vst.msk [vmem:[#allocation0] sm:$0x1] %vm33, %v32
    %s35 = scalar_lea.vmem %s0, 10
    %v36 = vld [vmem:[%s35] sm:$0x1]
    %37 = vrot.lane.b32.xlu0 %v36, 80
    %v38 = vpop.permute.xlu0 %37
    %vm39 = vcmask 720512
    %40 = vst.msk [vmem:[#allocation0] sm:$0x1] %vm39, %v38
    %s41 = scalar_lea.vmem %s0, 9
    %v42 = vld [vmem:[%s41] sm:$0x1]
    %43 = vrot.lane.b32.xlu0 %v42, 72
    %v44 = vpop.permute.xlu0 %43
    %vm45 = vcmask 654912
    %46 = vst.msk [vmem:[#allocation0] sm:$0x1] %vm45, %v44
    %s47 = scalar_lea.vmem %s0, 8
    %v48 = vld [vmem:[%s47] sm:$0x1]
    %49 = vrot.lane.b32.xlu0 %v48, 64
    %v50 = vpop.permute.xlu0 %49
    %vm51 = vcmask 589312
    %52 = vst.msk [vmem:[#allocation0] sm:$0x1] %vm51, %v50
    %s53 = scalar_lea.vmem %s0, 7
    %v54 = vld [vmem:[%s53] sm:$0x1]
    %55 = vrot.lane.b32.xlu0 %v54, 56
    %v56 = vpop.permute.xlu0 %55
    %vm57 = vcmask 523712
    %58 = vst.msk [vmem:[#allocation0] sm:$0x1] %vm57, %v56
    %s59 = scalar_lea.vmem %s0, 6
    %v60 = vld [vmem:[%s59] sm:$0x1]
    %61 = vrot.lane.b32.xlu0 %v60, 48
    %v62 = vpop.permute.xlu0 %61
    %vm63 = vcmask 458112
    %64 = vst.msk [vmem:[#allocation0] sm:$0x1] %vm63, %v62
    %s65 = scalar_lea.vmem %s0, 5
    %v66 = vld [vmem:[%s65] sm:$0x1]
    %67 = vrot.lane.b32.xlu0 %v66, 40
    %v68 = vpop.permute.xlu0 %67
    %vm69 = vcmask 392512
    %70 = vst.msk [vmem:[#allocation0] sm:$0x1] %vm69, %v68
    %s71 = scalar_lea.vmem %s0, 4
    %v72 = vld [vmem:[%s71] sm:$0x1]
    %73 = vrot.lane.b32.xlu0 %v72, 32
    %v74 = vpop.permute.xlu0 %73
    %vm75 = vcmask 326912
    %76 = vst.msk [vmem:[#allocation0] sm:$0x1] %vm75, %v74
    %s77 = scalar_lea.vmem %s0, 3
    %v78 = vld [vmem:[%s77] sm:$0x1]
    %79 = vrot.lane.b32.xlu0 %v78, 24
    %v80 = vpop.permute.xlu0 %79
    %vm81 = vcmask 261312
    %82 = vst.msk [vmem:[#allocation0] sm:$0x1] %vm81, %v80
    %s83 = scalar_lea.vmem %s0, 2
    %v84 = vld [vmem:[%s83] sm:$0x1]
    %85 = vrot.lane.b32.xlu0 %v84, 16
    %v86 = vpop.permute.xlu0 %85
    %vm87 = vcmask 195712
    %88 = vst.msk [vmem:[#allocation0] sm:$0x1] %vm87, %v86
    %s89 = scalar_lea.vmem %s0, 1
    %v90 = vld [vmem:[%s89] sm:$0x1]
    %91 = vrot.lane.b32.xlu0 %v90, 8
    %v92 = vpop.permute.xlu0 %91
    %vm93 = vcmask 130112
    %94 = vst.msk [vmem:[#allocation0] sm:$0x1] %vm93, %v92
    %s96 = sshllo.u32 0, 1
    %v98 = vld [vmem:[#allocation0] sm:%s96]
    %s99 = sshllo.u32 0, 1
    %100 = vst [vmem:[%s1] sm:%s99] %v98

// kernel: basic_block_forward.1
$region0: #{basic_block_forward.1}
  #allocation0 [shape = 'u32[]', space=smem, size = 0x4, offset = 0x4, fixed_abs, tag = 'smem constant byte address 0x4 - core index']
  #allocation1 [shape = 'u32[144,128]{1,0:T(1,128)}', space=vmem, size = 0x12000, scoped, tag = 'internal scratch']
  %s0 = inlined_call_operand.vmem [shape: f32[4,16,128], index: 0, kind: input, shape index: {}]
  %s1 = inlined_call_operand.vmem [shape: bf16[384,128], index: 1, kind: input, shape index: {}]
  %s2 = inlined_call_operand.vmem [shape: f32[1,128], index: 2, kind: input, shape index: {}]
  %s3 = inlined_call_operand.vmem [shape: bf16[384,128], index: 3, kind: input, shape index: {}]
  %s4 = inlined_call_operand.vmem [shape: f32[1,128], index: 4, kind: input, shape index: {}]
  %s5 = inlined_call_operand.vmem [shape: f32[4,16,128], index: 5, kind: output, shape index: {}]
  %s6 = sld [smem:[#allocation0]]
  $region53: #{basic_block_forward.1} parent=0
    _
  %s8 = ssub.s32 1, %s6
  %s9 = scalar_select 0, %s8, %s6
  loop: start=0, step=1, limit=4
  $region2: #{basic_block_forward.1} parent=0 // loop_pre_header
    _
  $region3: #{basic_block_forward.1} parent=0 // loop_header
    %s11 = sphi 0, %s15
    %p12 = scmp.ge.s32.totalorder %s11, 4
    %s21 = sphi 0, %s23
    %s24 = sphi 0, %s21
    %s25 = sphi 0, %s24
    %s41 = sphi 0, %s25
    %s45 = sphi 0, %s45
    %s47 = sphi 0, %s45
    %s48 = sphi 0, %s47
    %s62 = sphi 0, %s48
    %s66 = sphi 0, %s66
    %s68 = sphi 0, %s66
    %s69 = sphi 0, %s68
    %s83 = sphi 0, %s69
    %s87 = sphi 0, %s87
    %s89 = sphi 0, %s87
    %s90 = sphi 0, %s89
    %s104 = sphi 0, %s90
    %s108 = sphi 0, %s108
    %s110 = sphi 0, %s108
    %s111 = sphi 0, %s110
    %s125 = sphi 0, %s111
    %s131 = sphi 0, %s133
    %s134 = sphi 0, %s131
    %s135 = sphi 0, %s134
    %s151 = sphi 0, %s135
  $region4: #{basic_block_forward.1} parent=0 // loop_header_branch
    %14 = sbr.rel (%p12) target = $region8
  $region5: #{basic_block_forward.1} parent=0 // loop_body
    %s16 = ssub.s32 %s11, 1
    %s17 = ssub.s32 %s11, 2
    %s18 = sadd.s32 %s11, 1
    %s19 = ssub.s32 %s11, %s18
    %p20 = scmp.eq.s32.totalorder %s19, 0
    %s22 = sadd.s32 %s21, 1
    %s23 = scalar_select %p20, %s21, %s22
    %p26 = pneg %p20
    %p27 = scmp.eq.s32.totalorder %s11, 1
    %p28 = por %p26, %p27
    %p29 = scmp.ne.s32.totalorder %s21, %s24
    %p30 = scmp.eq.s32.totalorder %s11, 0
    %p31 = por %p29, %p30
    %p32 = scmp.ne.s32.totalorder %s21, %s24
    %p33 = scmp.eq.s32.totalorder %s16, 1
    %p34 = por %p32, %p33
    %p35 = scmp.ne.s32.totalorder %s24, %s25
    %p36 = scmp.eq.s32.totalorder %s16, 0
    %p37 = por %p35, %p36
    %p38 = scmp.ne.s32.totalorder %s24, %s25
    %p39 = scmp.eq.s32.totalorder %s17, 1
    %p40 = por %p38, %p39
    %p42 = scmp.ne.s32.totalorder %s25, %s41
    %p43 = scmp.eq.s32.totalorder %s17, 0
    %p44 = por %p42, %p43
    %s46 = sadd.s32 %s45, 1
    %p49 = scmp.eq.s32.totalorder %s11, 1
    %p50 = scmp.ne.s32.totalorder %s45, %s47
    %p51 = scmp.eq.s32.totalorder %s11, 0
    %p52 = por %p50, %p51
    %p53 = scmp.ne.s32.totalorder %s45, %s47
    %p54 = scmp.eq.s32.totalorder %s16, 1
    %p55 = por %p53, %p54
    %p56 = scmp.ne.s32.totalorder %s47, %s48
    %p57 = scmp.eq.s32.totalorder %s16, 0
    %p58 = por %p56, %p57
    %p59 = scmp.ne.s32.totalorder %s47, %s48
    %p60 = scmp.eq.s32.totalorder %s17, 1
    %p61 = por %p59, %p60
    %p63 = scmp.ne.s32.totalorder %s48, %s62
    %p64 = scmp.eq.s32.totalorder %s17, 0
    %p65 = por %p63, %p64
    %s67 = sadd.s32 %s66, 1
    %p70 = scmp.eq.s32.totalorder %s11, 1
    %p71 = scmp.ne.s32.totalorder %s66, %s68
    %p72 = scmp.eq.s32.totalorder %s11, 0
    %p73 = por %p71, %p72
    %p74 = scmp.ne.s32.totalorder %s66, %s68
    %p75 = scmp.eq.s32.totalorder %s16, 1
    %p76 = por %p74, %p75
    %p77 = scmp.ne.s32.totalorder %s68, %s69
    %p78 = scmp.eq.s32.totalorder %s16, 0
    %p79 = por %p77, %p78
    %p80 = scmp.ne.s32.totalorder %s68, %s69
    %p81 = scmp.eq.s32.totalorder %s17, 1
    %p82 = por %p80, %p81
    %p84 = scmp.ne.s32.totalorder %s69, %s83
    %p85 = scmp.eq.s32.totalorder %s17, 0
    %p86 = por %p84, %p85
    %s88 = sadd.s32 %s87, 1
    %p91 = scmp.eq.s32.totalorder %s11, 1
    %p92 = scmp.ne.s32.totalorder %s87, %s89
    %p93 = scmp.eq.s32.totalorder %s11, 0
    %p94 = por %p92, %p93
    %p95 = scmp.ne.s32.totalorder %s87, %s89
    %p96 = scmp.eq.s32.totalorder %s16, 1
    %p97 = por %p95, %p96
    %p98 = scmp.ne.s32.totalorder %s89, %s90
    %p99 = scmp.eq.s32.totalorder %s16, 0
    %p100 = por %p98, %p99
    %p101 = scmp.ne.s32.totalorder %s89, %s90
    %p102 = scmp.eq.s32.totalorder %s17, 1
    %p103 = por %p101, %p102
    %p105 = scmp.ne.s32.totalorder %s90, %s104
    %p106 = scmp.eq.s32.totalorder %s17, 0
    %p107 = por %p105, %p106
    %s109 = sadd.s32 %s108, 1
    %p112 = scmp.eq.s32.totalorder %s11, 1
    %p113 = scmp.ne.s32.totalorder %s108, %s110
    %p114 = scmp.eq.s32.totalorder %s11, 0
    %p115 = por %p113, %p114
    %p116 = scmp.ne.s32.totalorder %s108, %s110
    %p117 = scmp.eq.s32.totalorder %s16, 1
    %p118 = por %p116, %p117
    %p119 = scmp.ne.s32.totalorder %s110, %s111
    %p120 = scmp.eq.s32.totalorder %s16, 0
    %p121 = por %p119, %p120
    %p122 = scmp.ne.s32.totalorder %s110, %s111
    %p123 = scmp.eq.s32.totalorder %s17, 1
    %p124 = por %p122, %p123
    %p126 = scmp.ne.s32.totalorder %s111, %s125
    %p127 = scmp.eq.s32.totalorder %s17, 0
    %p128 = por %p126, %p127
    %s129 = ssub.s32 %s11, %s18
    %p130 = scmp.eq.s32.totalorder %s129, 0
    %s132 = sadd.s32 %s131, 1
    %s133 = scalar_select %p130, %s131, %s132
    %p136 = pneg %p130
    %p137 = scmp.eq.s32.totalorder %s11, 1
    %p138 = por %p136, %p137
    %p139 = scmp.ne.s32.totalorder %s131, %s134
    %p140 = scmp.eq.s32.totalorder %s11, 0
    %p141 = por %p139, %p140
    %p142 = scmp.ne.s32.totalorder %s131, %s134
    %p143 = scmp.eq.s32.totalorder %s16, 1
    %p144 = por %p142, %p143
    %p145 = scmp.ne.s32.totalorder %s134, %s135
    %p146 = scmp.eq.s32.totalorder %s16, 0
    %p147 = por %p145, %p146
    %p148 = scmp.ne.s32.totalorder %s134, %s135
    %p149 = scmp.eq.s32.totalorder %s17, 1
    %p150 = por %p148, %p149
    %p152 = scmp.ne.s32.totalorder %s135, %s151
    %p153 = scmp.eq.s32.totalorder %s17, 0
    %p154 = por %p152, %p153
    %p155 = scmp.le.s32.totalorder 1, %s11
    %p156 = scmp.lt.s32.totalorder %s11, 3
    %p157 = pnand %p155, %p156
    %p158 = pneg %p157
    // Predicated region
    $region9: #{basic_block_forward.1} parent=5 // pred_check
      _
    $region10: #{basic_block_forward.1} parent=5 // pred_check_branch
      %160 = sbr.rel (%p157) target = $region12
    $region11: #{basic_block_forward.1} parent=5 // pred_region
      %s161 = ssub.s32 %s11, 1
      // Predicated region
      $region13: #{basic_block_forward.1} parent=11 // pred_check
        %p162 = pneg %p58
      $region14: #{basic_block_forward.1} parent=11 // pred_check_branch
        %164 = sbr.rel (%p162) target = $region16
      $region15: #{basic_block_forward.1} parent=11 // pred_region
        _
      $region16: #{basic_block_forward.1} parent=11 // pred_fallthru
        _
      // Predicated region
      $region17: #{basic_block_forward.1} parent=11 // pred_check
        %p165 = pneg %p79
      $region18: #{basic_block_forward.1} parent=11 // pred_check_branch
        %167 = sbr.rel (%p165) target = $region20
      $region19: #{basic_block_forward.1} parent=11 // pred_region
        _
      $region20: #{basic_block_forward.1} parent=11 // pred_fallthru
        _
      // Predicated region
      $region21: #{basic_block_forward.1} parent=11 // pred_check
        %p168 = pneg %p100
      $region22: #{basic_block_forward.1} parent=11 // pred_check_branch
        %170 = sbr.rel (%p168) target = $region24
      $region23: #{basic_block_forward.1} parent=11 // pred_region
        _
      $region24: #{basic_block_forward.1} parent=11 // pred_fallthru
        _
      // Predicated region
      $region25: #{basic_block_forward.1} parent=11 // pred_check
        %p171 = pneg %p121
      $region26: #{basic_block_forward.1} parent=11 // pred_check_branch
        %173 = sbr.rel (%p171) target = $region28
      $region27: #{basic_block_forward.1} parent=11 // pred_region
        _
      $region28: #{basic_block_forward.1} parent=11 // pred_fallthru
        _
    $region12: #{basic_block_forward.1} parent=5 // pred_fallthru
      _
    %p174 = scmp.lt.s32.totalorder %s11, 2
    // Predicated region
    $region29: #{basic_block_forward.1} parent=5 // pred_check
      %p175 = pneg %p174
    $region30: #{basic_block_forward.1} parent=5 // pred_check_branch
      %177 = sbr.rel (%p175) target = $region32
    $region31: #{basic_block_forward.1} parent=5 // pred_region
      // Predicated region
      $region33: #{basic_block_forward.1} parent=31 // pred_check
        %p178 = pneg %p31
      $region34: #{basic_block_forward.1} parent=31 // pred_check_branch
        %180 = sbr.rel (%p178) target = $region36
      $region35: #{basic_block_forward.1} parent=31 // pred_region
        %s181 = smul.u32 2, %s11
        %p182 = scmp.lt.s32.totalorder %s181, 3
        %s183 = scalar_select %p182, %s181, 3
        %s184 = smul.addr %s183, 2
        %s185 = smul.addr %s184, 8
        %s186 = scalar_lea.vmem %s0, %s185
        %s187 = smul.u32 2, %s11
      $region36: #{basic_block_forward.1} parent=31 // pred_fallthru
        _
    $region32: #{basic_block_forward.1} parent=5 // pred_fallthru
      _
    %p188 = scmp.le.s32.totalorder 1, %s11
    %p189 = scmp.lt.s32.totalorder %s11, 3
    %p190 = pnand %p188, %p189
    %p191 = pneg %p190
    // Predicated region
    $region37: #{basic_block_forward.1} parent=5 // pred_check
      _
    $region38: #{basic_block_forward.1} parent=5 // pred_check_branch
      %193 = sbr.rel (%p190) target = $region40
    $region39: #{basic_block_forward.1} parent=5 // pred_region
      %s194 = ssub.s32 %s11, 1
      %s195 = smul.u32 2, %s16
      %p196 = scmp.lt.s32.totalorder %s195, 3
      %s197 = scalar_select %p196, %s195, 3
      %s198 = smul.addr %s197, 2
      %s199 = smul.addr %s198, 8
      %s200 = scalar_lea.vmem %s0, %s199
      %p201 = pneg %p37
      %p202 = pneg %p34
      %p203 = pneg %p58
      %p204 = pneg %p55
      %p205 = pneg %p79
      %p206 = pneg %p76
      %p207 = pneg %p100
      %p208 = pneg %p97
      %p209 = pneg %p121
      %p210 = pneg %p118
      %p211 = pneg %p147
      %p212 = pneg %p144
      %s213 = smul.u32 2, %s16
      %p214 = scmp.lt.s32.totalorder %s213, 3
      %s215 = scalar_select %p214, %s213, 3
      %s216 = smul.addr %s215, 2
      %s217 = smul.addr %s216, 8
      %s218 = scalar_lea.vmem %s5, %s217
      %s219 = smul.u32 2, %s16
      %p220 = scmp.lt.s32.totalorder %s219, 3
      %s221 = scalar_select %p220, %s219, 3
      %s222 = smul.addr %s221, 2
      %s223 = smul.addr %s222, 8
      %s224 = scalar_lea.vmem %s0, %s223
      %s225 = smul.u32 2, %s16
      %s226 = smul.u32 2, %s16
      %p227 = scmp.lt.s32.totalorder %s226, 3
      %s228 = scalar_select %p227, %s226, 3
      %s229 = smul.addr %s228, 2
      %s230 = smul.addr %s229, 8
      %s231 = scalar_lea.vmem %s5, %s230
      %s232 = smul.u32 2, %s16
      %v234 = vld [vmem:[%s224] sm:$0xff]
      %v235 = vld [vmem:[%s224 + $0x8] sm:$0xff]
      %v236 = vld [vmem:[%s224 + $0x10] sm:$0xff]
      %v237 = vld [vmem:[%s224 + $0x18] sm:$0xff]
      %v238 = vlaneseq
      %v239 = vshrl.u32 %v238, 7
      %v240 = vadd.s32 %v239, 8
      %v241 = vadd.s32 %v239, 16
      %v242 = vadd.s32 %v239, 24
      %vm243 = vcmp.lt.s32.totalorder %v239, 0
      %v244 = vsub.s32 0, %v239
      %v245 = vsel %vm243, %v244, %v239
      %v246 = vshrl.u32 %v245, 4
      %v247 = vand.u32 %v245, 15
      %v248 = vsub.s32 0, %v247
      %v249 = vsel %vm243, %v248, %v247
      %vm250 = vcmp.lt.s32.totalorder %v240, 0
      %v251 = vsub.s32 0, %v240
      %v252 = vsel %vm250, %v251, %v240
      %v253 = vshrl.u32 %v252, 4
      %v254 = vand.u32 %v252, 15
      %v255 = vsub.s32 0, %v254
      %v256 = vsel %vm250, %v255, %v254
      %vm257 = vcmp.lt.s32.totalorder %v241, 0
      %v258 = vsub.s32 0, %v241
      %v259 = vsel %vm257, %v258, %v241
      %v260 = vshrl.u32 %v259, 4
      %v261 = vand.u32 %v259, 15
      %v262 = vsub.s32 0, %v261
      %v263 = vsel %vm257, %v262, %v261
      %vm264 = vcmp.lt.s32.totalorder %v242, 0
      %v265 = vsub.s32 0, %v242
      %v266 = vsel %vm264, %v265, %v242
      %v267 = vshrl.u32 %v266, 4
      %v268 = vand.u32 %v266, 15
      %v269 = vsub.s32 0, %v268
      %v270 = vsel %vm264, %v269, %v268
      %vm271 = vcmp.ne.s32.totalorder %v249, 0
      %vm272 = vcmp.ne.s32.totalorder %v256, 0
      %vm273 = vcmp.ne.s32.totalorder %v263, 0
      %vm274 = vcmp.ne.s32.totalorder %v270, 0
      %vm275 = vcmp.ne.s32.totalorder %v249, 15
      %vm276 = vcmp.ne.s32.totalorder %v256, 15
      %vm277 = vcmp.ne.s32.totalorder %v263, 15
      %vm278 = vcmp.ne.s32.totalorder %v270, 15
      %v279 = vld [vmem:[%s2] sm:$0x1]
      %v280 = vld [vmem:[%s4] sm:$0x1]
      %vm285 = vcmask 1040384
      %v286 = vrot.slane %v234, 7
      %v287 = vrot.slane %v235, 7
      %v288 = vsel %vm285, %v286, %v287
      %v289 = vrot.slane %v236, 7
      %v290 = vsel %vm285, %v287, %v289
      %v291 = vrot.slane %v237, 7
      %v292 = vsel %vm285, %v289, %v291
      %v297 = vsel %vm285, 0.0, %v286
      %vm298 = vcmask 1046528
      %v299 = vrot.slane %v234, 1
      %v300 = vrot.slane %v235, 1
      %v301 = vsel %vm298, %v299, %v300
      %v302 = vrot.slane %v236, 1
      %v303 = vsel %vm298, %v300, %v302
      %v304 = vrot.slane %v237, 1
      %v305 = vsel %vm298, %v302, %v304
      %v310 = vsel %vm298, %v304, 0.0
      %v311 = vsel %vm271, %v297, 0.0
      %v312 = vsel %vm272, %v288, 0.0
      %v313 = vsel %vm273, %v290, 0.0
      %v314 = vsel %vm274, %v292, 0.0
      %v315 = vsel %vm275, %v301, 0.0
      %v316 = vsel %vm276, %v303, 0.0
      %v317 = vsel %vm277, %v305, 0.0
      %v318 = vsel %vm278, %v310, 0.0
      %v319 = vpack.c.bf16 %v312, %v311
      %v320 = vpack.c.bf16 %v235, %v234
      %v321 = vpack.c.bf16 %v316, %v315
      %v322 = vpack.c.bf16 %v314, %v313
      %v323 = vpack.c.bf16 %v237, %v236
      %v324 = vpack.c.bf16 %v318, %v317
      %v325 = vld [vmem:[%s1] sm:$0xf]
      %v326 = vld [vmem:[%s1 + $0x4] sm:$0xf]
      %v327 = vld [vmem:[%s1 + $0x8] sm:$0xf]
      %v328 = vld [vmem:[%s1 + $0xc] sm:$0xf]
      %v329 = vld [vmem:[%s1 + $0x10] sm:$0xf]
      %v330 = vld [vmem:[%s1 + $0x14] sm:$0xf]
      %v331 = vld [vmem:[%s1 + $0x18] sm:$0xf]
      %v332 = vld [vmem:[%s1 + $0x1c] sm:$0xf]
      %v333 = vld [vmem:[%s1 + $0x20] sm:$0xf]
      %v334 = vld [vmem:[%s1 + $0x24] sm:$0xf]
      %v335 = vld [vmem:[%s1 + $0x28] sm:$0xf]
      %v336 = vld [vmem:[%s1 + $0x2c] sm:$0xf]
      %v337 = vld [vmem:[%s1 + $0x30] sm:$0xf]
      %v338 = vld [vmem:[%s1 + $0x34] sm:$0xf]
      %v339 = vld [vmem:[%s1 + $0x38] sm:$0xf]
      %v340 = vld [vmem:[%s1 + $0x3c] sm:$0xf]
      %v341 = vld [vmem:[%s1 + $0x40] sm:$0xf]
      %v342 = vld [vmem:[%s1 + $0x44] sm:$0xf]
      %v343 = vld [vmem:[%s1 + $0x48] sm:$0xf]
      %v344 = vld [vmem:[%s1 + $0x4c] sm:$0xf]
      %v345 = vld [vmem:[%s1 + $0x50] sm:$0xf]
      %v346 = vld [vmem:[%s1 + $0x54] sm:$0xf]
      %v347 = vld [vmem:[%s1 + $0x58] sm:$0xf]
      %v348 = vld [vmem:[%s1 + $0x5c] sm:$0xf]
      %v349 = vld [vmem:[%s1 + $0x60] sm:$0xf]
      %v350 = vld [vmem:[%s1 + $0x64] sm:$0xf]
      %v351 = vld [vmem:[%s1 + $0x68] sm:$0xf]
      %v352 = vld [vmem:[%s1 + $0x6c] sm:$0xf]
      %v353 = vld [vmem:[%s1 + $0x70] sm:$0xf]
      %v354 = vld [vmem:[%s1 + $0x74] sm:$0xf]
      %v355 = vld [vmem:[%s1 + $0x78] sm:$0xf]
      %v356 = vld [vmem:[%s1 + $0x7c] sm:$0xf]
      %v357 = vld [vmem:[%s1 + $0x80] sm:$0xf]
      %v358 = vld [vmem:[%s1 + $0x84] sm:$0xf]
      %v359 = vld [vmem:[%s1 + $0x88] sm:$0xf]
      %v360 = vld [vmem:[%s1 + $0x8c] sm:$0xf]
      %v361 = vld [vmem:[%s1 + $0x90] sm:$0xf]
      %v362 = vld [vmem:[%s1 + $0x94] sm:$0xf]
      %v363 = vld [vmem:[%s1 + $0x98] sm:$0xf]
      %v364 = vld [vmem:[%s1 + $0x9c] sm:$0xf]
      %v365 = vld [vmem:[%s1 + $0xa0] sm:$0xf]
      %v366 = vld [vmem:[%s1 + $0xa4] sm:$0xf]
      %v367 = vld [vmem:[%s1 + $0xa8] sm:$0xf]
      %v368 = vld [vmem:[%s1 + $0xac] sm:$0xf]
      %v369 = vld [vmem:[%s1 + $0xb0] sm:$0xf]
      %v370 = vld [vmem:[%s1 + $0xb4] sm:$0xf]
      %v371 = vld [vmem:[%s1 + $0xb8] sm:$0xf]
      %v372 = vld [vmem:[%s1 + $0xbc] sm:$0xf]
      %v374 = vlaneseq
      %v375 = vshrl.u32 %v374, 7
      %v376 = vsub.s32 0, %v375
      %v377 = vrot.slane %v279, %v376
      %v427 = vunpack.c.l.b16 %v325
      %v428 = vunpack.c.l.b16 %v326
      %v429 = vunpack.c.l.b16 %v327
      %v430 = vunpack.c.l.b16 %v328
      %v431 = vunpack.c.l.b16 %v329
      %v432 = vunpack.c.l.b16 %v330
      %v433 = vunpack.c.l.b16 %v331
      %v434 = vunpack.c.l.b16 %v332
      %v435 = vunpack.c.l.b16 %v333
      %v436 = vunpack.c.l.b16 %v334
      %v437 = vunpack.c.l.b16 %v335
      %v438 = vunpack.c.l.b16 %v336
      %v439 = vunpack.c.l.b16 %v337
      %v440 = vunpack.c.l.b16 %v338
      %v441 = vunpack.c.l.b16 %v339
      %v442 = vunpack.c.l.b16 %v340
      %v443 = vunpack.c.l.b16 %v341
      %v444 = vunpack.c.l.b16 %v342
      %v445 = vunpack.c.l.b16 %v343
      %v446 = vunpack.c.l.b16 %v344
      %v447 = vunpack.c.l.b16 %v345
      %v448 = vunpack.c.l.b16 %v346
      %v449 = vunpack.c.l.b16 %v347
      %v450 = vunpack.c.l.b16 %v348
      %v451 = vunpack.c.l.b16 %v349
      %v452 = vunpack.c.l.b16 %v350
      %v453 = vunpack.c.l.b16 %v351
      %v454 = vunpack.c.l.b16 %v352
      %v455 = vunpack.c.l.b16 %v353
      %v456 = vunpack.c.l.b16 %v354
      %v457 = vunpack.c.l.b16 %v355
      %v458 = vunpack.c.l.b16 %v356
      %v459 = vunpack.c.l.b16 %v357
      %v460 = vunpack.c.l.b16 %v358
      %v461 = vunpack.c.l.b16 %v359
      %v462 = vunpack.c.l.b16 %v360
      %v463 = vunpack.c.l.b16 %v361
      %v464 = vunpack.c.l.b16 %v362
      %v465 = vunpack.c.l.b16 %v363
      %v466 = vunpack.c.l.b16 %v364
      %v467 = vunpack.c.l.b16 %v365
      %v468 = vunpack.c.l.b16 %v366
      %v469 = vunpack.c.l.b16 %v367
      %v470 = vunpack.c.l.b16 %v368
      %v471 = vunpack.c.l.b16 %v369
      %v472 = vunpack.c.l.b16 %v370
      %v473 = vunpack.c.l.b16 %v371
      %v474 = vunpack.c.l.b16 %v372
      %v475 = vpack.c.b16 %v428, %v427
      %v476 = vpack.c.b16 %v430, %v429
      %v477 = vpack.c.b16 %v432, %v431
      %v478 = vpack.c.b16 %v434, %v433
      %v479 = vpack.c.b16 %v436, %v435
      %v480 = vpack.c.b16 %v438, %v437
      %v481 = vpack.c.b16 %v440, %v439
      %v482 = vpack.c.b16 %v442, %v441
      %v483 = vpack.c.b16 %v444, %v443
      %v484 = vpack.c.b16 %v446, %v445
      %v485 = vpack.c.b16 %v448, %v447
      %v486 = vpack.c.b16 %v450, %v449
      %v487 = vpack.c.b16 %v452, %v451
      %v488 = vpack.c.b16 %v454, %v453
      %v489 = vpack.c.b16 %v456, %v455
      %v490 = vpack.c.b16 %v458, %v457
      %v491 = vpack.c.b16 %v460, %v459
      %v492 = vpack.c.b16 %v462, %v461
      %v493 = vpack.c.b16 %v464, %v463
      %v494 = vpack.c.b16 %v466, %v465
      %v495 = vpack.c.b16 %v468, %v467
      %v496 = vpack.c.b16 %v470, %v469
      %v497 = vpack.c.b16 %v472, %v471
      %v498 = vpack.c.b16 %v474, %v473
      %523 = vmatprep.subr.bf16.mxu0 0
      %524 = vmatpush1.bf16.msra.mxu0 %v475
      %525 = vmatprep.subr.bf16.mxu0 0
      %526 = vmatpush1.bf16.msra.mxu0 %v476
      %527 = vmatprep.subr.bf16.mxu0 0
      %528 = vmatpush1.bf16.msra.mxu0 %v477
      %529 = vmatprep.subr.bf16.mxu0 0
      %530 = vmatpush1.bf16.msra.mxu0 %v478
      %531 = vmatprep.subr.bf16.mxu0 0
      %532 = vmatpush1.bf16.msra.mxu0 %v479
      %533 = vmatprep.subr.bf16.mxu0 0
      %534 = vmatpush1.bf16.msra.mxu0 %v480
      %535 = vmatprep.subr.bf16.mxu0 0
      %536 = vmatpush1.bf16.msra.mxu0 %v481
      %537 = vmatprep.subr.bf16.mxu0 0
      %538 = vmatpush1.bf16.msra.mxu0 %v482
      %539 = vmatprep.subr.bf16.mxu0 0
      %540 = vmatpush1.bf16.msra.mxu0 %v483
      %541 = vmatprep.subr.bf16.mxu0 0
      %542 = vmatpush1.bf16.msra.mxu0 %v484
      %543 = vmatprep.subr.bf16.mxu0 0
      %544 = vmatpush1.bf16.msra.mxu0 %v485
      %545 = vmatprep.subr.bf16.mxu0 0
      %546 = vmatpush1.bf16.msra.mxu0 %v486
      %547 = vmatprep.subr.bf16.mxu0 0
      %548 = vmatpush1.bf16.msra.mxu0 %v487
      %549 = vmatprep.subr.bf16.mxu0 0
      %550 = vmatpush1.bf16.msra.mxu0 %v488
      %551 = vmatprep.subr.bf16.mxu0 0
      %552 = vmatpush1.bf16.msra.mxu0 %v489
      %553 = vmatprep.subr.bf16.mxu0 0
      %554 = vmatpush1.bf16.msra.mxu0 %v490
      %555 = vmatprep.mubr.bf16.mxu0 %v320
      %556 = vmatmul.mubr.bf16.gmra.mrb[0].mxu0 %v319
      %v557 = vpop.f32.mrb[0].mxu0
      %v558 = vadd.f32 %v377, %v557
      %v559 = vpop.f32.mrb[0].mxu0
      %v560 = vpop.f32.mrb[0].mxu0
      %v561 = vadd.f32 %v377, %v560
      %v562 = vpop.f32.mrb[0].mxu0
      %563 = vmatprep.mubr.bf16.mxu0 %v323
      %564 = vmatmul.mubr.bf16.gmra.mrb[0].mxu0 %v322
      %v565 = vpop.f32.mrb[0].mxu0
      %v566 = vadd.f32 %v377, %v565
      %v567 = vpop.f32.mrb[0].mxu0
      %v568 = vpop.f32.mrb[0].mxu0
      %v569 = vadd.f32 %v377, %v568
      %v570 = vpop.f32.mrb[0].mxu0
      %571 = vdwg.mxu0
      %572 = vmatprep.subr.bf16.mxu0 0
      %573 = vmatpush1.bf16.msra.mxu0 %v491
      %574 = vmatprep.subr.bf16.mxu0 0
      %575 = vmatpush1.bf16.msra.mxu0 %v492
      %576 = vmatprep.subr.bf16.mxu0 0
      %577 = vmatpush1.bf16.msra.mxu0 %v493
      %578 = vmatprep.subr.bf16.mxu0 0
      %579 = vmatpush1.bf16.msra.mxu0 %v494
      %580 = vmatprep.subr.bf16.mxu0 0
      %581 = vmatpush1.bf16.msra.mxu0 %v495
      %582 = vmatprep.subr.bf16.mxu0 0
      %583 = vmatpush1.bf16.msra.mxu0 %v496
      %584 = vmatprep.subr.bf16.mxu0 0
      %585 = vmatpush1.bf16.msra.mxu0 %v497
      %586 = vmatprep.subr.bf16.mxu0 0
      %587 = vmatpush1.bf16.msra.mxu0 %v498
      %588 = vmatprep.subr.bf16.mxu0 0
      %589 = vmatpush1.bf16.msra.mxu0 0
      %590 = vmatprep.subr.bf16.mxu0 0
      %591 = vmatpush1.bf16.msra.mxu0 0
      %592 = vmatprep.subr.bf16.mxu0 0
      %593 = vmatpush1.bf16.msra.mxu0 0
      %594 = vmatprep.subr.bf16.mxu0 0
      %595 = vmatpush1.bf16.msra.mxu0 0
      %596 = vmatprep.subr.bf16.mxu0 0
      %597 = vmatpush1.bf16.msra.mxu0 0
      %598 = vmatprep.subr.bf16.mxu0 0
      %599 = vmatpush1.bf16.msra.mxu0 0
      %600 = vmatprep.subr.bf16.mxu0 0
      %601 = vmatpush1.bf16.msra.mxu0 0
      %602 = vmatprep.subr.bf16.mxu0 0
      %603 = vmatpush1.bf16.msra.mxu0 0
      %604 = vmatprep.mubr.bf16.mxu0 0
      %605 = vmatmul.mubr.bf16.gmra.mrb[0].mxu0 %v321
      %v606 = vpop.f32.mrb[0].mxu0
      %v607 = vadd.f32 %v558, %v606
      %v608 = vpop.f32.mrb[0].mxu0
      %v609 = vpop.f32.mrb[0].mxu0
      %v610 = vadd.f32 %v561, %v609
      %v611 = vpop.f32.mrb[0].mxu0
      %612 = vmatprep.mubr.bf16.mxu0 0
      %613 = vmatmul.mubr.bf16.gmra.mrb[0].mxu0 %v324
      %v614 = vpop.f32.mrb[0].mxu0
      %v615 = vadd.f32 %v566, %v614
      %v616 = vpop.f32.mrb[0].mxu0
      %v617 = vpop.f32.mrb[0].mxu0
      %v618 = vadd.f32 %v569, %v617
      %v619 = vpop.f32.mrb[0].mxu0
      %620 = vdwg.mxu0
      %v621 = vmax.f32 %v607, 0.0
      %v622 = vmax.f32 %v610, 0.0
      %v623 = vmax.f32 %v615, 0.0
      %v624 = vmax.f32 %v618, 0.0
      %v629 = vrot.slane %v621, 7
      %v630 = vrot.slane %v622, 7
      %v631 = vsel %vm285, %v629, %v630
      %v632 = vrot.slane %v623, 7
      %v633 = vsel %vm285, %v630, %v632
      %v634 = vrot.slane %v624, 7
      %v635 = vsel %vm285, %v632, %v634
      %v640 = vsel %vm285, 0.0, %v629
      %v641 = vrot.slane %v621, 1
      %v642 = vrot.slane %v622, 1
      %v643 = vsel %vm298, %v641, %v642
      %v644 = vrot.slane %v623, 1
      %v645 = vsel %vm298, %v642, %v644
      %v646 = vrot.slane %v624, 1
      %v647 = vsel %vm298, %v644, %v646
      %v652 = vsel %vm298, %v646, 0.0
      %v653 = vsel %vm271, %v640, 0.0
      %v654 = vsel %vm272, %v631, 0.0
      %v655 = vsel %vm273, %v633, 0.0
      %v656 = vsel %vm274, %v635, 0.0
      %v657 = vsel %vm275, %v643, 0.0
      %v658 = vsel %vm276, %v645, 0.0
      %v659 = vsel %vm277, %v647, 0.0
      %v660 = vsel %vm278, %v652, 0.0
      %v661 = vpack.c.bf16 %v654, %v653
      %v662 = vpack.c.bf16 %v622, %v621
      %v663 = vpack.c.bf16 %v658, %v657
      %v664 = vpack.c.bf16 %v656, %v655
      %v665 = vpack.c.bf16 %v624, %v623
      %v666 = vpack.c.bf16 %v660, %v659
      %v667 = vld [vmem:[%s3] sm:$0xf]
      %v668 = vld [vmem:[%s3 + $0x4] sm:$0xf]
      %v669 = vld [vmem:[%s3 + $0x8] sm:$0xf]
      %v670 = vld [vmem:[%s3 + $0xc] sm:$0xf]
      %v671 = vld [vmem:[%s3 + $0x10] sm:$0xf]
      %v672 = vld [vmem:[%s3 + $0x14] sm:$0xf]
      %v673 = vld [vmem:[%s3 + $0x18] sm:$0xf]
      %v674 = vld [vmem:[%s3 + $0x1c] sm:$0xf]
      %v675 = vld [vmem:[%s3 + $0x20] sm:$0xf]
      %v676 = vld [vmem:[%s3 + $0x24] sm:$0xf]
      %v677 = vld [vmem:[%s3 + $0x28] sm:$0xf]
      %v678 = vld [vmem:[%s3 + $0x2c] sm:$0xf]
      %v679 = vld [vmem:[%s3 + $0x30] sm:$0xf]
      %v680 = vld [vmem:[%s3 + $0x34] sm:$0xf]
      %v681 = vld [vmem:[%s3 + $0x38] sm:$0xf]
      %v682 = vld [vmem:[%s3 + $0x3c] sm:$0xf]
      %v683 = vld [vmem:[%s3 + $0x40] sm:$0xf]
      %v684 = vld [vmem:[%s3 + $0x44] sm:$0xf]
      %v685 = vld [vmem:[%s3 + $0x48] sm:$0xf]
      %v686 = vld [vmem:[%s3 + $0x4c] sm:$0xf]
      %v687 = vld [vmem:[%s3 + $0x50] sm:$0xf]
      %v688 = vld [vmem:[%s3 + $0x54] sm:$0xf]
      %v689 = vld [vmem:[%s3 + $0x58] sm:$0xf]
      %v690 = vld [vmem:[%s3 + $0x5c] sm:$0xf]
      %v691 = vld [vmem:[%s3 + $0x60] sm:$0xf]
      %v692 = vld [vmem:[%s3 + $0x64] sm:$0xf]
      %v693 = vld [vmem:[%s3 + $0x68] sm:$0xf]
      %v694 = vld [vmem:[%s3 + $0x6c] sm:$0xf]
      %v695 = vld [vmem:[%s3 + $0x70] sm:$0xf]
      %v696 = vld [vmem:[%s3 + $0x74] sm:$0xf]
      %v697 = vld [vmem:[%s3 + $0x78] sm:$0xf]
      %v698 = vld [vmem:[%s3 + $0x7c] sm:$0xf]
      %v699 = vld [vmem:[%s3 + $0x80] sm:$0xf]
      %v700 = vld [vmem:[%s3 + $0x84] sm:$0xf]
      %v701 = vld [vmem:[%s3 + $0x88] sm:$0xf]
      %v702 = vld [vmem:[%s3 + $0x8c] sm:$0xf]
      %v703 = vld [vmem:[%s3 + $0x90] sm:$0xf]
      %v704 = vld [vmem:[%s3 + $0x94] sm:$0xf]
      %v705 = vld [vmem:[%s3 + $0x98] sm:$0xf]
      %v706 = vld [vmem:[%s3 + $0x9c] sm:$0xf]
      %v707 = vld [vmem:[%s3 + $0xa0] sm:$0xf]
      %v708 = vld [vmem:[%s3 + $0xa4] sm:$0xf]
      %v709 = vld [vmem:[%s3 + $0xa8] sm:$0xf]
      %v710 = vld [vmem:[%s3 + $0xac] sm:$0xf]
      %v711 = vld [vmem:[%s3 + $0xb0] sm:$0xf]
      %v712 = vld [vmem:[%s3 + $0xb4] sm:$0xf]
      %v713 = vld [vmem:[%s3 + $0xb8] sm:$0xf]
      %v714 = vld [vmem:[%s3 + $0xbc] sm:$0xf]
      %v716 = vlaneseq
      %v717 = vshrl.u32 %v716, 7
      %v718 = vsub.s32 0, %v717
      %v719 = vrot.slane %v280, %v718
      %v769 = vunpack.c.l.b16 %v667
      %v770 = vunpack.c.l.b16 %v668
      %v771 = vunpack.c.l.b16 %v669
      %v772 = vunpack.c.l.b16 %v670
      %v773 = vunpack.c.l.b16 %v671
      %v774 = vunpack.c.l.b16 %v672
      %v775 = vunpack.c.l.b16 %v673
      %v776 = vunpack.c.l.b16 %v674
      %v777 = vunpack.c.l.b16 %v675
      %v778 = vunpack.c.l.b16 %v676
      %v779 = vunpack.c.l.b16 %v677
      %v780 = vunpack.c.l.b16 %v678
      %v781 = vunpack.c.l.b16 %v679
      %v782 = vunpack.c.l.b16 %v680
      %v783 = vunpack.c.l.b16 %v681
      %v784 = vunpack.c.l.b16 %v682
      %v785 = vunpack.c.l.b16 %v683
      %v786 = vunpack.c.l.b16 %v684
      %v787 = vunpack.c.l.b16 %v685
      %v788 = vunpack.c.l.b16 %v686
      %v789 = vunpack.c.l.b16 %v687
      %v790 = vunpack.c.l.b16 %v688
      %v791 = vunpack.c.l.b16 %v689
      %v792 = vunpack.c.l.b16 %v690
      %v793 = vunpack.c.l.b16 %v691
      %v794 = vunpack.c.l.b16 %v692
      %v795 = vunpack.c.l.b16 %v693
      %v796 = vunpack.c.l.b16 %v694
      %v797 = vunpack.c.l.b16 %v695
      %v798 = vunpack.c.l.b16 %v696
      %v799 = vunpack.c.l.b16 %v697
      %v800 = vunpack.c.l.b16 %v698
      %v801 = vunpack.c.l.b16 %v699
      %v802 = vunpack.c.l.b16 %v700
      %v803 = vunpack.c.l.b16 %v701
      %v804 = vunpack.c.l.b16 %v702
      %v805 = vunpack.c.l.b16 %v703
      %v806 = vunpack.c.l.b16 %v704
      %v807 = vunpack.c.l.b16 %v705
      %v808 = vunpack.c.l.b16 %v706
      %v809 = vunpack.c.l.b16 %v707
      %v810 = vunpack.c.l.b16 %v708
      %v811 = vunpack.c.l.b16 %v709
      %v812 = vunpack.c.l.b16 %v710
      %v813 = vunpack.c.l.b16 %v711
      %v814 = vunpack.c.l.b16 %v712
      %v815 = vunpack.c.l.b16 %v713
      %v816 = vunpack.c.l.b16 %v714
      %v817 = vpack.c.b16 %v770, %v769
      %v818 = vpack.c.b16 %v772, %v771
      %v819 = vpack.c.b16 %v774, %v773
      %v820 = vpack.c.b16 %v776, %v775
      %v821 = vpack.c.b16 %v778, %v777
      %v822 = vpack.c.b16 %v780, %v779
      %v823 = vpack.c.b16 %v782, %v781
      %v824 = vpack.c.b16 %v784, %v783
      %v825 = vpack.c.b16 %v786, %v785
      %v826 = vpack.c.b16 %v788, %v787
      %v827 = vpack.c.b16 %v790, %v789
      %v828 = vpack.c.b16 %v792, %v791
      %v829 = vpack.c.b16 %v794, %v793
      %v830 = vpack.c.b16 %v796, %v795
      %v831 = vpack.c.b16 %v798, %v797
      %v832 = vpack.c.b16 %v800, %v799
      %v833 = vpack.c.b16 %v802, %v801
      %v834 = vpack.c.b16 %v804, %v803
      %v835 = vpack.c.b16 %v806, %v805
      %v836 = vpack.c.b16 %v808, %v807
      %v837 = vpack.c.b16 %v810, %v809
      %v838 = vpack.c.b16 %v812, %v811
      %v839 = vpack.c.b16 %v814, %v813
      %v840 = vpack.c.b16 %v816, %v815
      %865 = vmatprep.subr.bf16.mxu0 0
      %866 = vmatpush1.bf16.msra.mxu0 %v817
      %867 = vmatprep.subr.bf16.mxu0 0
      %868 = vmatpush1.bf16.msra.mxu0 %v818
      %869 = vmatprep.subr.bf16.mxu0 0
      %870 = vmatpush1.bf16.msra.mxu0 %v819
      %871 = vmatprep.subr.bf16.mxu0 0
      %872 = vmatpush1.bf16.msra.mxu0 %v820
      %873 = vmatprep.subr.bf16.mxu0 0
      %874 = vmatpush1.bf16.msra.mxu0 %v821
      %875 = vmatprep.subr.bf16.mxu0 0
      %876 = vmatpush1.bf16.msra.mxu0 %v822
      %877 = vmatprep.subr.bf16.mxu0 0
      %878 = vmatpush1.bf16.msra.mxu0 %v823
      %879 = vmatprep.subr.bf16.mxu0 0
      %880 = vmatpush1.bf16.msra.mxu0 %v824
      %881 = vmatprep.subr.bf16.mxu0 0
      %882 = vmatpush1.bf16.msra.mxu0 %v825
      %883 = vmatprep.subr.bf16.mxu0 0
      %884 = vmatpush1.bf16.msra.mxu0 %v826
      %885 = vmatprep.subr.bf16.mxu0 0
      %886 = vmatpush1.bf16.msra.mxu0 %v827
      %887 = vmatprep.subr.bf16.mxu0 0
      %888 = vmatpush1.bf16.msra.mxu0 %v828
      %889 = vmatprep.subr.bf16.mxu0 0
      %890 = vmatpush1.bf16.msra.mxu0 %v829
      %891 = vmatprep.subr.bf16.mxu0 0
      %892 = vmatpush1.bf16.msra.mxu0 %v830
      %893 = vmatprep.subr.bf16.mxu0 0
      %894 = vmatpush1.bf16.msra.mxu0 %v831
      %895 = vmatprep.subr.bf16.mxu0 0
      %896 = vmatpush1.bf16.msra.mxu0 %v832
      %897 = vmatprep.mubr.bf16.mxu0 %v662
      %898 = vmatmul.mubr.bf16.gmra.mrb[0].mxu0 %v661
      %v899 = vpop.f32.mrb[0].mxu0
      %v900 = vadd.f32 %v719, %v899
      %v901 = vpop.f32.mrb[0].mxu0
      %v902 = vpop.f32.mrb[0].mxu0
      %v903 = vadd.f32 %v719, %v902
      %v904 = vpop.f32.mrb[0].mxu0
      %905 = vmatprep.mubr.bf16.mxu0 %v665
      %906 = vmatmul.mubr.bf16.gmra.mrb[0].mxu0 %v664
      %v907 = vpop.f32.mrb[0].mxu0
      %v908 = vadd.f32 %v719, %v907
      %v909 = vpop.f32.mrb[0].mxu0
      %v910 = vpop.f32.mrb[0].mxu0
      %v911 = vadd.f32 %v719, %v910
      %v912 = vpop.f32.mrb[0].mxu0
      %913 = vdwg.mxu0
      %914 = vmatprep.subr.bf16.mxu0 0
      %915 = vmatpush1.bf16.msra.mxu0 %v833
      %916 = vmatprep.subr.bf16.mxu0 0
      %917 = vmatpush1.bf16.msra.mxu0 %v834
      %918 = vmatprep.subr.bf16.mxu0 0
      %919 = vmatpush1.bf16.msra.mxu0 %v835
      %920 = vmatprep.subr.bf16.mxu0 0
      %921 = vmatpush1.bf16.msra.mxu0 %v836
      %922 = vmatprep.subr.bf16.mxu0 0
      %923 = vmatpush1.bf16.msra.mxu0 %v837
      %924 = vmatprep.subr.bf16.mxu0 0
      %925 = vmatpush1.bf16.msra.mxu0 %v838
      %926 = vmatprep.subr.bf16.mxu0 0
      %927 = vmatpush1.bf16.msra.mxu0 %v839
      %928 = vmatprep.subr.bf16.mxu0 0
      %929 = vmatpush1.bf16.msra.mxu0 %v840
      %930 = vmatprep.subr.bf16.mxu0 0
      %931 = vmatpush1.bf16.msra.mxu0 0
      %932 = vmatprep.subr.bf16.mxu0 0
      %933 = vmatpush1.bf16.msra.mxu0 0
      %934 = vmatprep.subr.bf16.mxu0 0
      %935 = vmatpush1.bf16.msra.mxu0 0
      %936 = vmatprep.subr.bf16.mxu0 0
      %937 = vmatpush1.bf16.msra.mxu0 0
      %938 = vmatprep.subr.bf16.mxu0 0
      %939 = vmatpush1.bf16.msra.mxu0 0
      %940 = vmatprep.subr.bf16.mxu0 0
      %941 = vmatpush1.bf16.msra.mxu0 0
      %942 = vmatprep.subr.bf16.mxu0 0
      %943 = vmatpush1.bf16.msra.mxu0 0
      %944 = vmatprep.subr.bf16.mxu0 0
      %945 = vmatpush1.bf16.msra.mxu0 0
      %946 = vmatprep.mubr.bf16.mxu0 0
      %947 = vmatmul.mubr.bf16.gmra.mrb[0].mxu0 %v663
      %v948 = vpop.f32.mrb[0].mxu0
      %v949 = vadd.f32 %v900, %v948
      %v950 = vpop.f32.mrb[0].mxu0
      %v951 = vpop.f32.mrb[0].mxu0
      %v952 = vadd.f32 %v903, %v951
      %v953 = vpop.f32.mrb[0].mxu0
      %954 = vmatprep.mubr.bf16.mxu0 0
      %955 = vmatmul.mubr.bf16.gmra.mrb[0].mxu0 %v666
      %v956 = vpop.f32.mrb[0].mxu0
      %v957 = vadd.f32 %v908, %v956
      %v958 = vpop.f32.mrb[0].mxu0
      %v959 = vpop.f32.mrb[0].mxu0
      %v960 = vadd.f32 %v911, %v959
      %v961 = vpop.f32.mrb[0].mxu0
      %962 = vdwg.mxu0
      %v963 = vadd.f32 %v949, %v234
      %v964 = vadd.f32 %v952, %v235
      %v965 = vadd.f32 %v957, %v236
      %v966 = vadd.f32 %v960, %v237
      %v967 = vmax.f32 %v963, 0.0
      %v968 = vmax.f32 %v964, 0.0
      %v969 = vmax.f32 %v965, 0.0
      %v970 = vmax.f32 %v966, 0.0
      %971 = vst [vmem:[%s231] sm:$0xff] %v967
      %972 = vst [vmem:[%s231 + $0x8] sm:$0xff] %v968
      %973 = vst [vmem:[%s231 + $0x10] sm:$0xff] %v969
      %974 = vst [vmem:[%s231 + $0x18] sm:$0xff] %v970
      %s975 = smul.u32 2, %s16
      %p976 = scmp.lt.s32.totalorder %s975, 3
      %s977 = scalar_select %p976, %s975, 3
      %s978 = smul.addr %s977, 2
      %s979 = smul.addr %s978, 8
      %s980 = scalar_lea.vmem %s5, %s979
      // Predicated region
      $region41: #{basic_block_forward.1} parent=39 // pred_check
        %p981 = pneg %p144
      $region42: #{basic_block_forward.1} parent=39 // pred_check_branch
        %983 = sbr.rel (%p981) target = $region44
      $region43: #{basic_block_forward.1} parent=39 // pred_region
        %s984 = smul.u32 2, %s16
      $region44: #{basic_block_forward.1} parent=39 // pred_fallthru
        _
    $region40: #{basic_block_forward.1} parent=5 // pred_fallthru
      _
    %p985 = scmp.le.s32.totalorder 2, %s11
    // Predicated region
    $region45: #{basic_block_forward.1} parent=5 // pred_check
      %p986 = pneg %p985
    $region46: #{basic_block_forward.1} parent=5 // pred_check_branch
      %988 = sbr.rel (%p986) target = $region48
    $region47: #{basic_block_forward.1} parent=5 // pred_region
      %s989 = ssub.s32 %s11, 2
      // Predicated region
      $region49: #{basic_block_forward.1} parent=47 // pred_check
        %p990 = pneg %p150
      $region50: #{basic_block_forward.1} parent=47 // pred_check_branch
        %992 = sbr.rel (%p990) target = $region52
      $region51: #{basic_block_forward.1} parent=47 // pred_region
        %s993 = smul.u32 2, %s17
        %p994 = scmp.lt.s32.totalorder %s993, 3
        %s995 = scalar_select %p994, %s993, 3
        %s996 = smul.addr %s995, 2
        %s997 = smul.addr %s996, 8
        %s998 = scalar_lea.vmem %s5, %s997
      $region52: #{basic_block_forward.1} parent=47 // pred_fallthru
        _
    $region48: #{basic_block_forward.1} parent=5 // pred_fallthru
      _
  $region6: #{basic_block_forward.1} parent=0 // loop_footer
    %s15 = sadd.s32 1, %s11
  $region7: #{basic_block_forward.1} parent=0 // loop_footer_branch
    %10 = sbr.rel target = $region3
  $region8: #{basic_block_forward.1} parent=0 // loop_exit
    _

</llo_original>
